<compile_context>
chip_gen: v6e
topology: v6e:2x2x1
jax: 0.10.0
libtpu: 0.0.40
codegen_flags: <defaults>
</compile_context>

<pallas_src>
import jax
import jax.numpy as jnp
from jax.experimental import pallas as pl
from jax.experimental.pallas import tpu as pltpu

LANE = 128


def _round_up(x, m):
    return ((x + m - 1) // m) * m


def dqn_kernel(x_ref, w1_ref, b1_ref, w2_ref, b2_ref, w3_ref, b3_ref, o_ref):
    # All three layers fused: intermediates never leave VMEM.
    # Matmuls take bf16 operands (MXU fast path) and accumulate in f32;
    # bias adds and ReLU stay in f32 on the VPU.
    x = x_ref[...].astype(jnp.bfloat16)                          # cast in-kernel
    h1 = jnp.dot(x, w1_ref[...],
                 preferred_element_type=jnp.float32) + b1_ref[...]
    h1 = jnp.maximum(h1, 0.0)                                    # ReLU, f32
    h2 = jnp.dot(h1.astype(jnp.bfloat16), w2_ref[...],
                 preferred_element_type=jnp.float32) + b2_ref[...]
    h2 = jnp.maximum(h2, 0.0)                                    # ReLU, f32
    out = jnp.dot(h2.astype(jnp.bfloat16), w3_ref[...],
                  preferred_element_type=jnp.float32) + b3_ref[...]
    # W3/b3 are lane-padded for the MXU; store only the real action columns.
    o_ref[...] = out[:, : o_ref.shape[-1]].astype(o_ref.dtype)


def prepare_params(params):
    """One-time parameter prep (padding + dtype casts), hoisted off the call path."""
    w1, b1, w2, b2, w3, b3 = params
    hidden = w3.shape[0]
    out_dim = int(w3.shape[1])
    out_pad = _round_up(out_dim, LANE)
    w3p = jnp.zeros((hidden, out_pad), w3.dtype).at[:, :out_dim].set(w3)
    b3p = jnp.zeros((1, out_pad), b3.dtype).at[:, :out_dim].set(b3)
    prepared = (
        w1.astype(jnp.bfloat16), b1.astype(jnp.float32),
        w2.astype(jnp.bfloat16), b2.astype(jnp.float32),
        w3p.astype(jnp.bfloat16), b3p.astype(jnp.float32),
    )
    return jax.tree_util.tree_map(jnp.asarray, prepared), out_dim


def dqn_forward(x, prepared, out_dim, *, block_batch=512):
    """Forward pass. x: [batch, input_dim] f32. Returns [batch, out_dim] f32."""
    w1b, b1f, w2b, b2f, w3b, b3f = prepared
    batch, input_dim = x.shape

    # Batch tile: multiple of 16 (bf16 sublane pack); cap so large batches get
    # >= 2 grid steps (keeps both TensorCores busy on v7x megacore).
    tb = max(16, min(block_batch, _round_up((batch + 1) // 2, 16)))
    batch_pad = _round_up(batch, tb)
    xp = x
    if batch_pad != batch:
        xp = jnp.zeros((batch_pad, input_dim), x.dtype).at[:batch].set(x)

    # Weights/biases: full blocks whose index_map always returns block 0
    # -> stay VMEM-resident across the whole batch grid.
    resident = lambda arr: pl.BlockSpec(arr.shape, lambda i: (0,) * arr.ndim)

    out = pl.pallas_call(
        dqn_kernel,
        out_shape=jax.ShapeDtypeStruct((batch_pad, out_dim), jnp.float32),
        grid=(batch_pad // tb,),
        in_specs=[
            pl.BlockSpec((tb, input_dim), lambda i: (i, 0)),   # x row tile (streamed, f32)
            resident(w1b), resident(b1f),
            resident(w2b), resident(b2f),
            resident(w3b), resident(b3f),
        ],
        # Narrow output: last dim equals the full array dim -> legal block.
        out_specs=pl.BlockSpec((tb, out_dim), lambda i: (i, 0)),
        compiler_params=pltpu.CompilerParams(
            # Batch tiles are independent: shard across TCs on v7x megacore.
            dimension_semantics=("parallel",),
        ),
    )(xp, w1b, b1f, w2b, b2f, w3b, b3f)

    # Padded rows (outputs == bias) are dropped here.
    return out[:batch] if batch_pad != batch else out


def init_params(key, input_dim, output_dim, hidden=128):
    """Deterministic init mimicking PyTorch nn.Linear default (uniform +/- 1/sqrt(fan_in))."""
    ks = jax.random.split(key, 6)

    def linear(kw, kb, fan_in, fan_out):
        bound = 1.0 / jnp.sqrt(fan_in)
        w = jax.random.uniform(kw, (fan_in, fan_out), jnp.float32, -bound, bound)
        b = jax.random.uniform(kb, (1, fan_out), jnp.float32, -bound, bound)
        return w, b

    w1, b1 = linear(ks[0], ks[1], input_dim, hidden)
    w2, b2 = linear(ks[2], ks[3], hidden, hidden)
    w3, b3 = linear(ks[4], ks[5], hidden, output_dim)
    return (w1, b1, w2, b2, w3, b3)


def dqn_reference(x, params):
    w1, b1, w2, b2, w3, b3 = params
    h1 = jnp.maximum(x @ w1 + b1, 0.0)
    h2 = jnp.maximum(h1 @ w2 + b2, 0.0)
    return h2 @ w3 + b3


if __name__ == "__main__":
    key = jax.random.PRNGKey(0)
    k_params, k_x1, k_x2 = jax.random.split(key, 3)

    input_dim, output_dim = 16, 4
    params = init_params(k_params, input_dim, output_dim)
    prepared, out_dim = prepare_params(params)   # one-time prep, off the call path

    # Small case (single tile, padded batch).
    batch = 8
    x = jax.random.normal(k_x1, (batch, input_dim), jnp.float32)
    out = jax.block_until_ready(dqn_forward(x, prepared, out_dim))
    ref = dqn_reference(x, params)
    assert out.shape == (batch, output_dim)
    # bf16 matmul operands -> relax tolerance vs. the f32 reference.
    assert jnp.allclose(out, ref, atol=2e-2, rtol=2e-2)

    # Exercise the batch grid (multiple tiles + batch padding).
    batch2 = 300
    x2 = jax.random.normal(k_x2, (batch2, input_dim), jnp.float32)
    out2 = jax.block_until_ready(dqn_forward(x2, prepared, out_dim))
    ref2 = dqn_reference(x2, params)
    assert out2.shape == (batch2, output_dim)
    assert jnp.allclose(out2, ref2, atol=2e-2, rtol=2e-2)

    print("KERNEL_OK")
</pallas_src>

<mosaic_0001>
module attributes {stable_mosaic.version = 11 : i64} {
  func.func @dqn_kernel(%arg0: i32, %arg1: memref<16x16xf32, #tpu.memory_space<vmem>>, %arg2: memref<16x128xbf16, #tpu.memory_space<vmem>>, %arg3: memref<1x128xf32, #tpu.memory_space<vmem>>, %arg4: memref<128x128xbf16, #tpu.memory_space<vmem>>, %arg5: memref<1x128xf32, #tpu.memory_space<vmem>>, %arg6: memref<128x128xbf16, #tpu.memory_space<vmem>>, %arg7: memref<1x128xf32, #tpu.memory_space<vmem>>, %arg8: memref<16x4xf32, #tpu.memory_space<vmem>>) attributes {dimension_semantics = [#tpu.dimension_semantics<parallel>], iteration_bounds = array<i64: 1>, scalar_prefetch = 0 : i64, scratch_operands = 0 : i64, tpu.core_type = #tpu.core_type<tc>, window_params = [{transform_indices = @transform_0, window_bounds = array<i64: 16, 16>}, {pipeline_mode = #tpu.pipeline_mode<synchronous>, transform_indices = @transform_1, window_bounds = array<i64: 16, 128>}, {pipeline_mode = #tpu.pipeline_mode<synchronous>, transform_indices = @transform_2, window_bounds = array<i64: 1, 128>}, {pipeline_mode = #tpu.pipeline_mode<synchronous>, transform_indices = @transform_3, window_bounds = array<i64: 128, 128>}, {pipeline_mode = #tpu.pipeline_mode<synchronous>, transform_indices = @transform_4, window_bounds = array<i64: 1, 128>}, {pipeline_mode = #tpu.pipeline_mode<synchronous>, transform_indices = @transform_5, window_bounds = array<i64: 128, 128>}, {pipeline_mode = #tpu.pipeline_mode<synchronous>, transform_indices = @transform_6, window_bounds = array<i64: 1, 128>}, {transform_indices = @transform_7, window_bounds = array<i64: 16, 4>}]} {
    %c0 = arith.constant 0 : index
    %c0_0 = arith.constant 0 : index
    %0 = vector.load %arg1[%c0, %c0_0] : memref<16x16xf32, #tpu.memory_space<vmem>>, vector<16x16xf32>
    %1 = arith.truncf %0 : vector<16x16xf32> to vector<16x16xbf16>
    %c0_1 = arith.constant 0 : index
    %c0_2 = arith.constant 0 : index
    %2 = vector.load %arg2[%c0_1, %c0_2] : memref<16x128xbf16, #tpu.memory_space<vmem>>, vector<16x128xbf16>
    %cst = arith.constant dense<0.000000e+00> : vector<16x128xf32>
    %3 = tpu.matmul %1, %2, %cst {dimension_numbers = #tpu.dot_dimension_numbers<[1], [0], [0], [1], [0, 0, 1, 1], [], []>} : vector<16x16xbf16>, vector<16x128xbf16>, vector<16x128xf32> -> vector<16x128xf32>
    %c0_3 = arith.constant 0 : index
    %c0_4 = arith.constant 0 : index
    %4 = vector.load %arg3[%c0_3, %c0_4] : memref<1x128xf32, #tpu.memory_space<vmem>>, vector<1x128xf32>
    %5 = vector.broadcast %4 : vector<1x128xf32> to vector<16x128xf32>
    %6 = arith.addf %3, %5 : vector<16x128xf32>
    %cst_5 = arith.constant 0.000000e+00 : f32
    %7 = vector.broadcast %cst_5 : f32 to vector<16x128xf32>
    %8 = arith.maximumf %6, %7 : vector<16x128xf32>
    %9 = arith.truncf %8 : vector<16x128xf32> to vector<16x128xbf16>
    %c0_6 = arith.constant 0 : index
    %c0_7 = arith.constant 0 : index
    %10 = vector.load %arg4[%c0_6, %c0_7] : memref<128x128xbf16, #tpu.memory_space<vmem>>, vector<128x128xbf16>
    %cst_8 = arith.constant dense<0.000000e+00> : vector<16x128xf32>
    %11 = tpu.matmul %9, %10, %cst_8 {dimension_numbers = #tpu.dot_dimension_numbers<[1], [0], [0], [1], [0, 0, 1, 1], [], []>} : vector<16x128xbf16>, vector<128x128xbf16>, vector<16x128xf32> -> vector<16x128xf32>
    %c0_9 = arith.constant 0 : index
    %c0_10 = arith.constant 0 : index
    %12 = vector.load %arg5[%c0_9, %c0_10] : memref<1x128xf32, #tpu.memory_space<vmem>>, vector<1x128xf32>
    %13 = vector.broadcast %12 : vector<1x128xf32> to vector<16x128xf32>
    %14 = arith.addf %11, %13 : vector<16x128xf32>
    %cst_11 = arith.constant 0.000000e+00 : f32
    %15 = vector.broadcast %cst_11 : f32 to vector<16x128xf32>
    %16 = arith.maximumf %14, %15 : vector<16x128xf32>
    %17 = arith.truncf %16 : vector<16x128xf32> to vector<16x128xbf16>
    %c0_12 = arith.constant 0 : index
    %c0_13 = arith.constant 0 : index
    %18 = vector.load %arg6[%c0_12, %c0_13] : memref<128x128xbf16, #tpu.memory_space<vmem>>, vector<128x128xbf16>
    %cst_14 = arith.constant dense<0.000000e+00> : vector<16x128xf32>
    %19 = tpu.matmul %17, %18, %cst_14 {dimension_numbers = #tpu.dot_dimension_numbers<[1], [0], [0], [1], [0, 0, 1, 1], [], []>} : vector<16x128xbf16>, vector<128x128xbf16>, vector<16x128xf32> -> vector<16x128xf32>
    %c0_15 = arith.constant 0 : index
    %c0_16 = arith.constant 0 : index
    %20 = vector.load %arg7[%c0_15, %c0_16] : memref<1x128xf32, #tpu.memory_space<vmem>>, vector<1x128xf32>
    %21 = vector.broadcast %20 : vector<1x128xf32> to vector<16x128xf32>
    %22 = arith.addf %19, %21 : vector<16x128xf32>
    %23 = vector.extract_strided_slice %22 {offsets = [0, 0], sizes = [16, 4], strides = [1, 1]} : vector<16x128xf32> to vector<16x4xf32>
    %c0_17 = arith.constant 0 : index
    %c0_18 = arith.constant 0 : index
    %24 = vector.load %arg8[%c0_17, %c0_18] : memref<16x4xf32, #tpu.memory_space<vmem>>, vector<16x4xf32>
    tpu.vector_store %arg8[%c0_17, %c0_18], %23 {strides = array<i32>} : memref<16x4xf32, #tpu.memory_space<vmem>>, vector<16x4xf32>,
    return
  }
  func.func @transform_0(%arg0: i32) -> (i32, i32) {
    %c0_i32 = arith.constant 0 : i32
    %c0_i32_0 = arith.constant 0 : i32
    return %arg0, %c0_i32 : i32, i32
  }
  func.func @transform_1(%arg0: i32) -> (i32, i32) {
    %c0_i32 = arith.constant 0 : i32
    %c0_i32_0 = arith.constant 0 : i32
    %c0_i32_1 = arith.constant 0 : i32
    return %c0_i32, %c0_i32_0 : i32, i32
  }
  func.func @transform_2(%arg0: i32) -> (i32, i32) {
    %c0_i32 = arith.constant 0 : i32
    %c0_i32_0 = arith.constant 0 : i32
    %c0_i32_1 = arith.constant 0 : i32
    return %c0_i32, %c0_i32_0 : i32, i32
  }
  func.func @transform_3(%arg0: i32) -> (i32, i32) {
    %c0_i32 = arith.constant 0 : i32
    %c0_i32_0 = arith.constant 0 : i32
    %c0_i32_1 = arith.constant 0 : i32
    return %c0_i32, %c0_i32_0 : i32, i32
  }
  func.func @transform_4(%arg0: i32) -> (i32, i32) {
    %c0_i32 = arith.constant 0 : i32
    %c0_i32_0 = arith.constant 0 : i32
    %c0_i32_1 = arith.constant 0 : i32
    return %c0_i32, %c0_i32_0 : i32, i32
  }
  func.func @transform_5(%arg0: i32) -> (i32, i32) {
    %c0_i32 = arith.constant 0 : i32
    %c0_i32_0 = arith.constant 0 : i32
    %c0_i32_1 = arith.constant 0 : i32
    return %c0_i32, %c0_i32_0 : i32, i32
  }
  func.func @transform_6(%arg0: i32) -> (i32, i32) {
    %c0_i32 = arith.constant 0 : i32
    %c0_i32_0 = arith.constant 0 : i32
    %c0_i32_1 = arith.constant 0 : i32
    return %c0_i32, %c0_i32_0 : i32, i32
  }
  func.func @transform_7(%arg0: i32) -> (i32, i32) {
    %c0_i32 = arith.constant 0 : i32
    %c0_i32_0 = arith.constant 0 : i32
    return %arg0, %c0_i32 : i32, i32
  }
}

</mosaic_0001>

<llo_original>
// kernel: tpu_custom_call.1
$region0: #{tpu_custom_call.1}
  #allocation0 [shape = 'u32[]', space=smem, size = 0x4, offset = 0x4, fixed_abs, tag = 'smem constant byte address 0x4 - core index']
  #allocation1 [shape = 'u32[144,128]{1,0:T(1,128)}', space=vmem, size = 0x12000, scoped, tag = 'internal scratch']
  %s0 = inlined_call_operand.hbm [shape: f32[16,16], index: 0, kind: input, shape index: {}]
  %s1 = inlined_call_operand.hbm [shape: bf16[16,128], index: 1, kind: input, shape index: {}]
  %s2 = inlined_call_operand.vmem [shape: f32[1,128], index: 2, kind: input, shape index: {}]
  %s3 = inlined_call_operand.hbm [shape: bf16[128,128], index: 3, kind: input, shape index: {}]
  %s4 = inlined_call_operand.vmem [shape: f32[1,128], index: 4, kind: input, shape index: {}]
  %s5 = inlined_call_operand.hbm [shape: bf16[128,128], index: 5, kind: input, shape index: {}]
  %s6 = inlined_call_operand.vmem [shape: f32[1,128], index: 6, kind: input, shape index: {}]
  %s7 = inlined_call_operand.vmem [shape: f32[16,4], index: 7, kind: output, shape index: {}]
  %s8 = sld [smem:[#allocation0]]
  $region54: #{tpu_custom_call.1} parent=0
    _
  %s10 = ssub.s32 1, %s8
  %s11 = scalar_select 0, %s10, %s8
  $region1: #{tpu_custom_call.1} parent=0
    #allocation2 [shape = 'u8[8192]{0}', space=vmem, size = 0x2000, scoped, tag = 'input window, operand 0, single buffered']
    #allocation3 [shape = 's32[1]{0}', space=sflag, size = 0x4, scoped, tag = 'scoped memory for tpu_custom_call.1']
    #allocation4 [shape = 'u8[4096]{0}', space=vmem, size = 0x1000, scoped, tag = 'input window, operand 1, single buffered']
    #allocation5 [shape = 's32[1]{0}', space=sflag, size = 0x4, scoped, tag = 'scoped memory for tpu_custom_call.1']
    #allocation6 [shape = 'u8[32768]{0}', space=vmem, size = 0x8000, scoped, tag = 'input window, operand 3, single buffered']
    #allocation7 [shape = 'u8[32768]{0}', space=vmem, size = 0x8000, scoped, tag = 'input window, operand 5, single buffered']
    #allocation8 [shape = 's32[1]{0}', space=sflag, size = 0x4, scoped, tag = 'scoped memory for tpu_custom_call.1']
    %12 = vsyncpa [#allocation3], 0
    %13 = vsyncpa [#allocation5], 0
    %14 = vsyncpa [#allocation8], 0
    // Predicated region
    $region2: #{tpu_custom_call.1} parent=1 // pred_check
      _
    $region3: #{tpu_custom_call.1} parent=1 // pred_check_branch
      %16 = sbr.rel (0) target = $region5
    $region4: #{tpu_custom_call.1} parent=1 // pred_region
      %s18 = ssub.s32 256, 256
      %19 = vsyncadd [#allocation3], %s18
      %s20 = sshll.u32 [#allocation2], 4
      %s21 = int_to_ptr.vmem [resolvable:$true] %s20
      %26 = dma.hbm_to_vmem [thread:$0]  %s0, 256, %s21, [#allocation3], 128, 128, 8
    $region5: #{tpu_custom_call.1} parent=1 // pred_fallthru
      _
    // Predicated region
    $region6: #{tpu_custom_call.1} parent=1 // pred_check
      _
    $region7: #{tpu_custom_call.1} parent=1 // pred_check_branch
      %28 = sbr.rel (0) target = $region9
    $region8: #{tpu_custom_call.1} parent=1 // pred_region
      %s30 = ssub.s32 128, 128
      %31 = vsyncadd [#allocation5], %s30
      %s32 = sshll.u32 [#allocation4], 4
      %s33 = int_to_ptr.vmem [resolvable:$true] %s32
      %38 = dma.hbm_to_vmem [thread:$0]  %s1, 128, %s33, [#allocation5], 64, 64, 4
    $region9: #{tpu_custom_call.1} parent=1 // pred_fallthru
      _
    // Predicated region
    $region10: #{tpu_custom_call.1} parent=1 // pred_check
      _
    $region11: #{tpu_custom_call.1} parent=1 // pred_check_branch
      %40 = sbr.rel (0) target = $region13
    $region12: #{tpu_custom_call.1} parent=1 // pred_region
      _
    $region13: #{tpu_custom_call.1} parent=1 // pred_fallthru
      _
    // Predicated region
    $region14: #{tpu_custom_call.1} parent=1 // pred_check
      _
    $region15: #{tpu_custom_call.1} parent=1 // pred_check_branch
      %42 = sbr.rel (0) target = $region17
    $region16: #{tpu_custom_call.1} parent=1 // pred_region
      %s44 = ssub.s32 1024, 1024
      %45 = vsyncadd [#allocation5], %s44
      %s46 = sshll.u32 [#allocation6], 4
      %s47 = int_to_ptr.vmem [resolvable:$true] %s46
      %52 = dma.hbm_to_vmem [thread:$0]  %s3, 1024, %s47, [#allocation5], 64, 64, 4
    $region17: #{tpu_custom_call.1} parent=1 // pred_fallthru
      _
    // Predicated region
    $region18: #{tpu_custom_call.1} parent=1 // pred_check
      _
    $region19: #{tpu_custom_call.1} parent=1 // pred_check_branch
      %54 = sbr.rel (0) target = $region21
    $region20: #{tpu_custom_call.1} parent=1 // pred_region
      _
    $region21: #{tpu_custom_call.1} parent=1 // pred_fallthru
      _
    // Predicated region
    $region22: #{tpu_custom_call.1} parent=1 // pred_check
      _
    $region23: #{tpu_custom_call.1} parent=1 // pred_check_branch
      %56 = sbr.rel (0) target = $region25
    $region24: #{tpu_custom_call.1} parent=1 // pred_region
      %s58 = ssub.s32 1024, 1024
      %59 = vsyncadd [#allocation8], %s58
      %s60 = sshll.u32 [#allocation7], 4
      %s61 = int_to_ptr.vmem [resolvable:$true] %s60
      %66 = dma.hbm_to_vmem [thread:$0]  %s5, 1024, %s61, [#allocation8], 64, 64, 4
    $region25: #{tpu_custom_call.1} parent=1 // pred_fallthru
      _
    // Predicated region
    $region26: #{tpu_custom_call.1} parent=1 // pred_check
      _
    $region27: #{tpu_custom_call.1} parent=1 // pred_check_branch
      %68 = sbr.rel (0) target = $region29
    $region28: #{tpu_custom_call.1} parent=1 // pred_region
      _
    $region29: #{tpu_custom_call.1} parent=1 // pred_fallthru
      _
    // Predicated region
    $region30: #{tpu_custom_call.1} parent=1 // pred_check
      _
    $region31: #{tpu_custom_call.1} parent=1 // pred_check_branch
      %70 = sbr.rel (0) target = $region33
    $region32: #{tpu_custom_call.1} parent=1 // pred_region
      %71 = dma.done [#allocation3], 256
    $region33: #{tpu_custom_call.1} parent=1 // pred_fallthru
      _
    // Predicated region
    $region34: #{tpu_custom_call.1} parent=1 // pred_check
      _
    $region35: #{tpu_custom_call.1} parent=1 // pred_check_branch
      %73 = sbr.rel (0) target = $region37
    $region36: #{tpu_custom_call.1} parent=1 // pred_region
      %74 = dma.done [#allocation5], 128
    $region37: #{tpu_custom_call.1} parent=1 // pred_fallthru
      _
    // Predicated region
    $region38: #{tpu_custom_call.1} parent=1 // pred_check
      _
    $region39: #{tpu_custom_call.1} parent=1 // pred_check_branch
      %76 = sbr.rel (0) target = $region41
    $region40: #{tpu_custom_call.1} parent=1 // pred_region
      %77 = dma.done [#allocation5], 1024
    $region41: #{tpu_custom_call.1} parent=1 // pred_fallthru
      _
    // Predicated region
    $region42: #{tpu_custom_call.1} parent=1 // pred_check
      _
    $region43: #{tpu_custom_call.1} parent=1 // pred_check_branch
      %79 = sbr.rel (0) target = $region45
    $region44: #{tpu_custom_call.1} parent=1 // pred_region
      %80 = dma.done [#allocation8], 1024
    $region45: #{tpu_custom_call.1} parent=1 // pred_fallthru
      _
    %v82 = vld [vmem:[#allocation2] sm:$0xff]
    %v83 = vld [vmem:[#allocation2 + $0x8] sm:$0xff]
    %v84 = vpack.c.bf16 %v83, %v82
    %v85 = vld [vmem:[#allocation4] sm:$0xf]
    %v86 = vld [vmem:[#allocation4 + $0x4] sm:$0xf]
    %v87 = vld [vmem:[%s2] sm:$0x1]
    %v89 = vlaneseq
    %v90 = vshrl.u32 %v89, 7
    %v91 = vsub.s32 0, %v90
    %v92 = vrot.slane %v87, %v91
    %v96 = vunpack.c.l.b16 %v85
    %v97 = vunpack.c.l.b16 %v86
    %v98 = vpack.c.b16 %v97, %v96
    %vm100 = vcmask 130048
    %v102 = vsel %vm100, %v84, 0
    %104 = vmatprep.subr.bf16.mxu0 0
    %105 = vmatpush1.bf16.msra.mxu0 0
    %106 = vmatprep.subr.bf16.mxu0 0
    %107 = vmatpush1.bf16.msra.mxu0 0
    %108 = vmatprep.subr.bf16.mxu0 0
    %109 = vmatpush1.bf16.msra.mxu0 0
    %110 = vmatprep.subr.bf16.mxu0 0
    %111 = vmatpush1.bf16.msra.mxu0 0
    %112 = vmatprep.subr.bf16.mxu0 0
    %113 = vmatpush1.bf16.msra.mxu0 0
    %114 = vmatprep.subr.bf16.mxu0 0
    %115 = vmatpush1.bf16.msra.mxu0 0
    %116 = vmatprep.subr.bf16.mxu0 0
    %117 = vmatpush1.bf16.msra.mxu0 0
    %118 = vmatprep.subr.bf16.mxu0 0
    %119 = vmatpush1.bf16.msra.mxu0 %v98
    %120 = vmatprep.subr.bf16.mxu0 0
    %121 = vmatpush2.bf16.msra.mxu0 0
    %122 = vmatprep.subr.bf16.mxu0 0
    %123 = vmatpush2.bf16.msra.mxu0 0
    %124 = vmatprep.subr.bf16.mxu0 0
    %125 = vmatpush2.bf16.msra.mxu0 0
    %126 = vmatprep.subr.bf16.mxu0 0
    %127 = vmatpush2.bf16.msra.mxu0 0
    %128 = vmatprep.subr.bf16.mxu0 0
    %129 = vmatpush2.bf16.msra.mxu0 0
    %130 = vmatprep.subr.bf16.mxu0 0
    %131 = vmatpush2.bf16.msra.mxu0 0
    %132 = vmatprep.subr.bf16.mxu0 0
    %133 = vmatpush2.bf16.msra.mxu0 0
    %134 = vmatprep.subr.bf16.mxu0 0
    %135 = vmatpush2.bf16.msra.mxu0 0
    %136 = vmatprep.mubr.bf16.mxu0 0
    %137 = vmatmul.mubr.bf16.gmra.mxu0 %v102
    %v138 = vpop.f32.mrf.mxu0
    %v139 = vadd.f32 %v92, %v138
    %v140 = vpop.f32.mrf.mxu0
    %v141 = vpop.f32.mrf.mxu0
    %v142 = vadd.f32 %v92, %v141
    %v143 = vpop.f32.mrf.mxu0
    %144 = vdwg.mxu0
    %v145 = vmax.f32 %v139, 0.0
    %v146 = vmax.f32 %v142, 0.0
    %v147 = vpack.c.bf16 %v146, %v145
    %v148 = vld [vmem:[#allocation6] sm:$0xf]
    %v149 = vld [vmem:[#allocation6 + $0x4] sm:$0xf]
    %v150 = vld [vmem:[#allocation6 + $0x8] sm:$0xf]
    %v151 = vld [vmem:[#allocation6 + $0xc] sm:$0xf]
    %v152 = vld [vmem:[#allocation6 + $0x10] sm:$0xf]
    %v153 = vld [vmem:[#allocation6 + $0x14] sm:$0xf]
    %v154 = vld [vmem:[#allocation6 + $0x18] sm:$0xf]
    %v155 = vld [vmem:[#allocation6 + $0x1c] sm:$0xf]
    %v156 = vld [vmem:[#allocation6 + $0x20] sm:$0xf]
    %v157 = vld [vmem:[#allocation6 + $0x24] sm:$0xf]
    %v158 = vld [vmem:[#allocation6 + $0x28] sm:$0xf]
    %v159 = vld [vmem:[#allocation6 + $0x2c] sm:$0xf]
    %v160 = vld [vmem:[#allocation6 + $0x30] sm:$0xf]
    %v161 = vld [vmem:[#allocation6 + $0x34] sm:$0xf]
    %v162 = vld [vmem:[#allocation6 + $0x38] sm:$0xf]
    %v163 = vld [vmem:[#allocation6 + $0x3c] sm:$0xf]
    %v164 = vld [vmem:[%s4] sm:$0x1]
    %v166 = vlaneseq
    %v167 = vshrl.u32 %v166, 7
    %v168 = vsub.s32 0, %v167
    %v169 = vrot.slane %v164, %v168
    %v187 = vunpack.c.l.b16 %v148
    %v188 = vunpack.c.l.b16 %v149
    %v189 = vunpack.c.l.b16 %v150
    %v190 = vunpack.c.l.b16 %v151
    %v191 = vunpack.c.l.b16 %v152
    %v192 = vunpack.c.l.b16 %v153
    %v193 = vunpack.c.l.b16 %v154
    %v194 = vunpack.c.l.b16 %v155
    %v195 = vunpack.c.l.b16 %v156
    %v196 = vunpack.c.l.b16 %v157
    %v197 = vunpack.c.l.b16 %v158
    %v198 = vunpack.c.l.b16 %v159
    %v199 = vunpack.c.l.b16 %v160
    %v200 = vunpack.c.l.b16 %v161
    %v201 = vunpack.c.l.b16 %v162
    %v202 = vunpack.c.l.b16 %v163
    %v203 = vpack.c.b16 %v188, %v187
    %v204 = vpack.c.b16 %v190, %v189
    %v205 = vpack.c.b16 %v192, %v191
    %v206 = vpack.c.b16 %v194, %v193
    %v207 = vpack.c.b16 %v196, %v195
    %v208 = vpack.c.b16 %v198, %v197
    %v209 = vpack.c.b16 %v200, %v199
    %v210 = vpack.c.b16 %v202, %v201
    %219 = vmatprep.subr.bf16.mxu0 0
    %220 = vmatpush1.bf16.msra.mxu0 %v210
    %221 = vmatprep.subr.bf16.mxu0 0
    %222 = vmatpush1.bf16.msra.mxu0 %v209
    %223 = vmatprep.subr.bf16.mxu0 0
    %224 = vmatpush1.bf16.msra.mxu0 %v208
    %225 = vmatprep.subr.bf16.mxu0 0
    %226 = vmatpush1.bf16.msra.mxu0 %v207
    %227 = vmatprep.subr.bf16.mxu0 0
    %228 = vmatpush1.bf16.msra.mxu0 %v206
    %229 = vmatprep.subr.bf16.mxu0 0
    %230 = vmatpush1.bf16.msra.mxu0 %v205
    %231 = vmatprep.subr.bf16.mxu0 0
    %232 = vmatpush1.bf16.msra.mxu0 %v204
    %233 = vmatprep.subr.bf16.mxu0 0
    %234 = vmatpush1.bf16.msra.mxu0 %v203
    %235 = vmatprep.subr.bf16.mxu0 0
    %236 = vmatpush2.bf16.msra.mxu0 0
    %237 = vmatprep.subr.bf16.mxu0 0
    %238 = vmatpush2.bf16.msra.mxu0 0
    %239 = vmatprep.subr.bf16.mxu0 0
    %240 = vmatpush2.bf16.msra.mxu0 0
    %241 = vmatprep.subr.bf16.mxu0 0
    %242 = vmatpush2.bf16.msra.mxu0 0
    %243 = vmatprep.subr.bf16.mxu0 0
    %244 = vmatpush2.bf16.msra.mxu0 0
    %245 = vmatprep.subr.bf16.mxu0 0
    %246 = vmatpush2.bf16.msra.mxu0 0
    %247 = vmatprep.subr.bf16.mxu0 0
    %248 = vmatpush2.bf16.msra.mxu0 0
    %249 = vmatprep.subr.bf16.mxu0 0
    %250 = vmatpush2.bf16.msra.mxu0 0
    %251 = vmatprep.mubr.bf16.mxu0 0
    %252 = vmatmul.mubr.bf16.gmra.mxu0 %v147
    %v253 = vpop.f32.mrf.mxu0
    %v254 = vadd.f32 %v169, %v253
    %v255 = vpop.f32.mrf.mxu0
    %v256 = vpop.f32.mrf.mxu0
    %v257 = vadd.f32 %v169, %v256
    %v258 = vpop.f32.mrf.mxu0
    %259 = vdwg.mxu0
    %v260 = vmax.f32 %v254, 0.0
    %v261 = vmax.f32 %v257, 0.0
    %v262 = vpack.c.bf16 %v261, %v260
    %v263 = vld [vmem:[#allocation7] sm:$0xf]
    %v264 = vld [vmem:[#allocation7 + $0x4] sm:$0xf]
    %v265 = vld [vmem:[#allocation7 + $0x8] sm:$0xf]
    %v266 = vld [vmem:[#allocation7 + $0xc] sm:$0xf]
    %v267 = vld [vmem:[#allocation7 + $0x10] sm:$0xf]
    %v268 = vld [vmem:[#allocation7 + $0x14] sm:$0xf]
    %v269 = vld [vmem:[#allocation7 + $0x18] sm:$0xf]
    %v270 = vld [vmem:[#allocation7 + $0x1c] sm:$0xf]
    %v271 = vld [vmem:[#allocation7 + $0x20] sm:$0xf]
    %v272 = vld [vmem:[#allocation7 + $0x24] sm:$0xf]
    %v273 = vld [vmem:[#allocation7 + $0x28] sm:$0xf]
    %v274 = vld [vmem:[#allocation7 + $0x2c] sm:$0xf]
    %v275 = vld [vmem:[#allocation7 + $0x30] sm:$0xf]
    %v276 = vld [vmem:[#allocation7 + $0x34] sm:$0xf]
    %v277 = vld [vmem:[#allocation7 + $0x38] sm:$0xf]
    %v278 = vld [vmem:[#allocation7 + $0x3c] sm:$0xf]
    %v279 = vld [vmem:[%s6] sm:$0x1]
    %v281 = vlaneseq
    %v282 = vshrl.u32 %v281, 7
    %v283 = vsub.s32 0, %v282
    %v284 = vrot.slane %v279, %v283
    %v302 = vunpack.c.l.b16 %v263
    %v303 = vunpack.c.l.b16 %v264
    %v304 = vunpack.c.l.b16 %v265
    %v305 = vunpack.c.l.b16 %v266
    %v306 = vunpack.c.l.b16 %v267
    %v307 = vunpack.c.l.b16 %v268
    %v308 = vunpack.c.l.b16 %v269
    %v309 = vunpack.c.l.b16 %v270
    %v310 = vunpack.c.l.b16 %v271
    %v311 = vunpack.c.l.b16 %v272
    %v312 = vunpack.c.l.b16 %v273
    %v313 = vunpack.c.l.b16 %v274
    %v314 = vunpack.c.l.b16 %v275
    %v315 = vunpack.c.l.b16 %v276
    %v316 = vunpack.c.l.b16 %v277
    %v317 = vunpack.c.l.b16 %v278
    %v318 = vpack.c.b16 %v303, %v302
    %v319 = vpack.c.b16 %v305, %v304
    %v320 = vpack.c.b16 %v307, %v306
    %v321 = vpack.c.b16 %v309, %v308
    %v322 = vpack.c.b16 %v311, %v310
    %v323 = vpack.c.b16 %v313, %v312
    %v324 = vpack.c.b16 %v315, %v314
    %v325 = vpack.c.b16 %v317, %v316
    %334 = vmatprep.subr.bf16.mxu0 0
    %335 = vmatpush1.bf16.msra.mxu0 %v325
    %336 = vmatprep.subr.bf16.mxu0 0
    %337 = vmatpush1.bf16.msra.mxu0 %v324
    %338 = vmatprep.subr.bf16.mxu0 0
    %339 = vmatpush1.bf16.msra.mxu0 %v323
    %340 = vmatprep.subr.bf16.mxu0 0
    %341 = vmatpush1.bf16.msra.mxu0 %v322
    %342 = vmatprep.subr.bf16.mxu0 0
    %343 = vmatpush1.bf16.msra.mxu0 %v321
    %344 = vmatprep.subr.bf16.mxu0 0
    %345 = vmatpush1.bf16.msra.mxu0 %v320
    %346 = vmatprep.subr.bf16.mxu0 0
    %347 = vmatpush1.bf16.msra.mxu0 %v319
    %348 = vmatprep.subr.bf16.mxu0 0
    %349 = vmatpush1.bf16.msra.mxu0 %v318
    %350 = vmatprep.subr.bf16.mxu0 0
    %351 = vmatpush2.bf16.msra.mxu0 0
    %352 = vmatprep.subr.bf16.mxu0 0
    %353 = vmatpush2.bf16.msra.mxu0 0
    %354 = vmatprep.subr.bf16.mxu0 0
    %355 = vmatpush2.bf16.msra.mxu0 0
    %356 = vmatprep.subr.bf16.mxu0 0
    %357 = vmatpush2.bf16.msra.mxu0 0
    %358 = vmatprep.subr.bf16.mxu0 0
    %359 = vmatpush2.bf16.msra.mxu0 0
    %360 = vmatprep.subr.bf16.mxu0 0
    %361 = vmatpush2.bf16.msra.mxu0 0
    %362 = vmatprep.subr.bf16.mxu0 0
    %363 = vmatpush2.bf16.msra.mxu0 0
    %364 = vmatprep.subr.bf16.mxu0 0
    %365 = vmatpush2.bf16.msra.mxu0 0
    %366 = vmatprep.mubr.bf16.mxu0 0
    %367 = vmatmul.mubr.bf16.gmra.mxu0 %v262
    %v368 = vpop.f32.mrf.mxu0
    %v369 = vadd.f32 %v284, %v368
    %v370 = vpop.f32.mrf.mxu0
    %v371 = vpop.f32.mrf.mxu0
    %v372 = vadd.f32 %v284, %v371
    %v373 = vpop.f32.mrf.mxu0
    %374 = vdwg.mxu0
    %vm375 = vcmask 31744
    %376 = vst.msk [vmem:[%s7] sm:$0xff] %vm375, %v369
    %377 = vst.msk [vmem:[%s7 + $0x8] sm:$0xff] %vm375, %v372
    // Predicated region
    $region46: #{tpu_custom_call.1} parent=1 // pred_check
      _
    $region47: #{tpu_custom_call.1} parent=1 // pred_check_branch
      %379 = sbr.rel (0) target = $region49
    $region48: #{tpu_custom_call.1} parent=1 // pred_region
      _
    $region49: #{tpu_custom_call.1} parent=1 // pred_fallthru
      _
    // Predicated region
    $region50: #{tpu_custom_call.1} parent=1 // pred_check
      _
    $region51: #{tpu_custom_call.1} parent=1 // pred_check_branch
      %381 = sbr.rel (0) target = $region53
    $region52: #{tpu_custom_call.1} parent=1 // pred_region
      _
    $region53: #{tpu_custom_call.1} parent=1 // pred_fallthru
      _
    %382 = vsyncpa [#allocation3], 1
    %383 = vsyncpa [#allocation5], 1
    %384 = vsyncpa [#allocation8], 1

</llo_original>
